<compile_context>
chip_gen: v6e
topology: v6e:2x2x1
jax: 0.10.0
libtpu: 0.0.40
codegen_flags: <defaults>
</compile_context>

<pallas_src>
import functools

import jax
import jax.numpy as jnp
import numpy as np
from jax import lax
from jax.experimental import pallas as pl
from jax.experimental.pallas import tpu as pltpu

K = 9          # kernel_size
STRIDE = 2
PAD = 4
OUT_PAD = 1
TAPS = 5       # ceil(K / STRIDE): taps per phase per spatial dim


def _pick_nb(N, HW, NT):
    """Images per grid step: widen the matmul N-dim (lanes) while keeping
    >= 2 grid steps (megacore sharding) and a small VMEM scratch."""
    best = 1
    for nb in range(1, N + 1):
        if N % nb:
            continue
        if N >= 2 and N // nb < 2:          # keep >= 2 grid steps
            continue
        if nb * HW > 2048:                  # matmul N-dim (lane) target
            continue
        if NT * nb * HW * 4 > (8 << 20):    # patch scratch cap (v7x-safe)
            continue
        best = nb
    return best


def _deconv_kernel(x_ref, w_ref, b_ref, m_ref, o_ref, p_ref,
                   *, H, W, Cin_p, Nb, Lp):
    """One grid step = Nb images.

    x_ref: (Cin_p, Nb*Lp)      per-image row-halo-padded, flattened, zero-
                               padded to Lp = roundup((H+4)*W, 128) lanes
    w_ref: (4*Cout, NT)        per-phase weights, tap-major / channel-minor
    b_ref: (4*Cout, 1)         bias (replicated per parity phase)
    m_ref: (TAPS, Cin_p, HW)   width-wrap masks (pre-broadcast over channels)
    o_ref: (4*Cout, Nb*HW)     phase-major output (de-interleaved in wrapper)
    p_ref: (NT, Nb*HW) f32     VMEM scratch: shared im2col patch
    """
    HW = H * W

    # Hoist the width-wrap masks out of the tap loop (dw == 2 needs none).
    mask_v = [m_ref[d] if d != 2 else None for d in range(TAPS)]

    # im2col: patch row (dh*TAPS + dw)*Cin_p + ci, column n*HW + ph*W + pw
    # holds x[img n, ci, ph + dh - 2, pw + dw - 2] (0 outside the image).
    for n in range(Nb):
        xin = x_ref[:, n * Lp:(n + 1) * Lp]              # (Cin_p, Lp) aligned
        for dh in range(TAPS):
            for dw in range(TAPS):
                shift = (2 - dw - dh * W) % Lp           # static lane rotate
                src = pltpu.roll(xin, shift, 1) if shift else xin
                blk = src[:, :HW]                        # aligned slice
                if dw != 2:                              # wrap columns -> 0
                    blk = blk * mask_v[dw]
                r0 = (dh * TAPS + dw) * Cin_p
                p_ref[r0:r0 + Cin_p, n * HW:(n + 1) * HW] = blk

    # One fat MXU matmul: all 4 parity phases of all Nb images at once.
    res = jnp.dot(w_ref[...], p_ref[...], preferred_element_type=jnp.float32)
    res = res + b_ref[...]
    o_ref[...] = res.astype(o_ref.dtype)


@jax.jit
def transp_conv_forward(x, w, b):
    """Forward of transp_conv.deconv_layer.

    x: (N, Cin, H, W) float32 (NCHW)
    w: (Cin, Cout, K, K)      (PyTorch ConvTranspose2d weight layout)
    b: (Cout,)
    returns (N, Cout, 2H, 2W)
    """
    N, Cin, H, W = x.shape
    Cout = w.shape[1]
    HW = H * W
    Cin_p = ((Cin + 7) // 8) * 8                     # channel pad -> full tiles
    Hp = H + 2 * 2                                   # +2 halo rows top/bottom
    Lp = ((Hp * W + 127) // 128) * 128               # lane-aligned flat length
    NT = TAPS * TAPS * Cin_p                         # exact contraction length
    Nb = _pick_nb(N, HW, NT)

    # ---- input: pad channels->Cin_p, rows +2/+2, flatten, pad to Lp lanes,
    #      concatenate images on the lane axis -> (Cin_p, N*Lp) -------------
    xp = jnp.pad(x, ((0, 0), (0, Cin_p - Cin), (2, 2), (0, 0)))
    xf = xp.reshape(N, Cin_p, Hp * W)
    xf = jnp.pad(xf, ((0, 0), (0, 0), (0, Lp - Hp * W)))
    xcat = jnp.transpose(xf, (1, 0, 2)).reshape(Cin_p, N * Lp)
    xcat = xcat.astype(jnp.float32)

    # ---- per-phase weight matrix (4*Cout, NT) ------------------------------
    # phase (r, s) = (oh % 2, ow % 2); tap (dh, dw) reads x[ph+dh-2, pw+dw-2]
    # with original weight index kh = 8-2*dh (r=0) / 9-2*dh (r=1, dh>=1).
    k_idx = jnp.array([[8, 6, 4, 2, 0], [0, 7, 5, 3, 1]], dtype=jnp.int32)
    k_val = jnp.array([[1, 1, 1, 1, 1], [0, 1, 1, 1, 1]], dtype=w.dtype)
    wg = w[:, :, k_idx, :]                          # (Cin, Cout, r, dh, K)
    wg = wg[:, :, :, :, k_idx]                      # (Cin, Cout, r, dh, s, dw)
    wg = wg * k_val[None, None, :, :, None, None]
    wg = wg * k_val[None, None, None, None, :, :]
    wt = jnp.transpose(wg, (2, 4, 1, 3, 5, 0))      # (r, s, Cout, dh, dw, Cin)
    wt = jnp.pad(wt, ((0, 0),) * 5 + ((0, Cin_p - Cin),))
    wmat = wt.reshape(4 * Cout, NT).astype(jnp.float32)

    b_k = jnp.tile(b, 4).reshape(4 * Cout, 1).astype(jnp.float32)

    # ---- width-wrap masks (static, host-built, pre-broadcast over Cin_p) ---
    pw_col = np.arange(HW) % W
    m_np = np.zeros((TAPS, Cin_p, HW), np.float32)
    for dw in range(TAPS):
        off = dw - 2
        valid = ((pw_col + off >= 0) & (pw_col + off < W)).astype(np.float32)
        m_np[dw, :, :] = valid[None, :]
    masks = jnp.asarray(m_np)

    kernel = functools.partial(_deconv_kernel,
                               H=H, W=W, Cin_p=Cin_p, Nb=Nb, Lp=Lp)

    out_ph = pl.pallas_call(
        kernel,
        out_shape=jax.ShapeDtypeStruct((4 * Cout, N * HW), x.dtype),
        grid=(N // Nb,),
        in_specs=[
            pl.BlockSpec((Cin_p, Nb * Lp), lambda i: (0, i)),
            pl.BlockSpec((4 * Cout, NT), lambda i: (0, 0)),
            pl.BlockSpec((4 * Cout, 1), lambda i: (0, 0)),
            pl.BlockSpec((TAPS, Cin_p, HW), lambda i: (0, 0, 0)),
        ],
        out_specs=pl.BlockSpec((4 * Cout, Nb * HW), lambda i: (0, i)),
        scratch_shapes=[pltpu.VMEM((NT, Nb * HW), jnp.float32)],
        compiler_params=pltpu.CompilerParams(
            dimension_semantics=("parallel",)),
    )(xcat, wmat, b_k, masks)

    # de-interleave the 4 parity phases into (N, Cout, 2H, 2W)
    out = out_ph.reshape(2, 2, Cout, N, H, W)          # (r, s, co, n, ph, pw)
    out = jnp.transpose(out, (3, 2, 4, 0, 5, 1))       # (n, co, ph, r, pw, s)
    return out.reshape(N, Cout, 2 * H, 2 * W)


def _reference(x, w, b):
    # Independent reference via XLA's dilated convolution.
    w_conv = jnp.transpose(w, (1, 0, 2, 3))[:, :, ::-1, ::-1]    # OIHW, flipped
    edge = K - 1 - PAD
    out = lax.conv_general_dilated(
        x, w_conv, window_strides=(1, 1),
        padding=((edge, edge + OUT_PAD), (edge, edge + OUT_PAD)),
        lhs_dilation=(STRIDE, STRIDE),
        dimension_numbers=("NCHW", "OIHW", "NCHW"),
        precision=lax.Precision.HIGHEST)
    return out + b[None, :, None, None]


if __name__ == "__main__":
    # small shapes consistent with the module: out1 (Cin)=4, img_filter (Cout)=3
    N, Cin, Cout, H, W = 2, 4, 3, 16, 16

    key = jax.random.PRNGKey(0)
    kx, kw_, kb_ = jax.random.split(key, 3)
    bound = 1.0 / np.sqrt(Cin * K * K)   # PyTorch-style uniform init bound
    x = jax.random.normal(kx, (N, Cin, H, W), dtype=jnp.float32)
    w = jax.random.uniform(kw_, (Cin, Cout, K, K), dtype=jnp.float32,
                           minval=-bound, maxval=bound)
    b = jax.random.uniform(kb_, (Cout,), dtype=jnp.float32,
                           minval=-bound, maxval=bound)

    out = jax.block_until_ready(transp_conv_forward(x, w, b))
    ref = jax.block_until_ready(_reference(x, w, b))

    assert out.shape == (N, Cout, 2 * H, 2 * W)
    np.testing.assert_allclose(np.asarray(out), np.asarray(ref),
                               rtol=1e-4, atol=1e-4)
    print("KERNEL_OK")
</pallas_src>

<mosaic_0001>
module attributes {stable_mosaic.version = 11 : i64} {
  func.func @_deconv_kernel(%arg0: i32, %arg1: memref<8x384xf32, #tpu.memory_space<vmem>>, %arg2: memref<12x200xf32, #tpu.memory_space<vmem>>, %arg3: memref<12x1xf32, #tpu.memory_space<vmem>>, %arg4: memref<5x8x256xf32, #tpu.memory_space<vmem>>, %arg5: memref<12x256xf32, #tpu.memory_space<vmem>>, %arg6: memref<200x256xf32, #tpu.memory_space<vmem>>) attributes {dimension_semantics = [#tpu.dimension_semantics<parallel>], iteration_bounds = array<i64: 2>, scalar_prefetch = 0 : i64, scratch_operands = 1 : i64, tpu.core_type = #tpu.core_type<tc>, window_params = [{transform_indices = @transform_0, window_bounds = array<i64: 8, 384>}, {pipeline_mode = #tpu.pipeline_mode<synchronous>, transform_indices = @transform_1, window_bounds = array<i64: 12, 200>}, {pipeline_mode = #tpu.pipeline_mode<synchronous>, transform_indices = @transform_2, window_bounds = array<i64: 12, 1>}, {pipeline_mode = #tpu.pipeline_mode<synchronous>, transform_indices = @transform_3, window_bounds = array<i64: 5, 8, 256>}, {transform_indices = @transform_4, window_bounds = array<i64: 12, 256>}]} {
    %c0 = arith.constant 0 : index
    %c0_0 = arith.constant 0 : index
    %c0_1 = arith.constant 0 : index
    %0 = vector.load %arg4[%c0, %c0_0, %c0_1] : memref<5x8x256xf32, #tpu.memory_space<vmem>>, vector<1x8x256xf32>
    %1 = vector.shape_cast %0 : vector<1x8x256xf32> to vector<8x256xf32>
    %c1 = arith.constant 1 : index
    %c0_2 = arith.constant 0 : index
    %c0_3 = arith.constant 0 : index
    %2 = vector.load %arg4[%c1, %c0_2, %c0_3] : memref<5x8x256xf32, #tpu.memory_space<vmem>>, vector<1x8x256xf32>
    %3 = vector.shape_cast %2 : vector<1x8x256xf32> to vector<8x256xf32>
    %c3 = arith.constant 3 : index
    %c0_4 = arith.constant 0 : index
    %c0_5 = arith.constant 0 : index
    %4 = vector.load %arg4[%c3, %c0_4, %c0_5] : memref<5x8x256xf32, #tpu.memory_space<vmem>>, vector<1x8x256xf32>
    %5 = vector.shape_cast %4 : vector<1x8x256xf32> to vector<8x256xf32>
    %c4 = arith.constant 4 : index
    %c0_6 = arith.constant 0 : index
    %c0_7 = arith.constant 0 : index
    %6 = vector.load %arg4[%c4, %c0_6, %c0_7] : memref<5x8x256xf32, #tpu.memory_space<vmem>>, vector<1x8x256xf32>
    %7 = vector.shape_cast %6 : vector<1x8x256xf32> to vector<8x256xf32>
    %c0_8 = arith.constant 0 : index
    %c0_9 = arith.constant 0 : index
    %8 = vector.load %arg1[%c0_8, %c0_9] : memref<8x384xf32, #tpu.memory_space<vmem>>, vector<8x384xf32>
    %c2_i32 = arith.constant 2 : i32
    %9 = tpu.dynamic_rotate %8 by %c2_i32 dim 1 : vector<8x384xf32>, i32 -> vector<8x384xf32>
    %10 = vector.extract_strided_slice %9 {offsets = [0, 0], sizes = [8, 256], strides = [1, 1]} : vector<8x384xf32> to vector<8x256xf32>
    %11 = arith.mulf %10, %1 : vector<8x256xf32>
    %c0_10 = arith.constant 0 : index
    %c0_11 = arith.constant 0 : index
    %12 = vector.load %arg6[%c0_10, %c0_11] : memref<200x256xf32, #tpu.memory_space<vmem>>, vector<8x256xf32>
    tpu.vector_store %arg6[%c0_10, %c0_11], %11 {strides = array<i32>} : memref<200x256xf32, #tpu.memory_space<vmem>>, vector<8x256xf32>,
    %c1_i32 = arith.constant 1 : i32
    %13 = tpu.dynamic_rotate %8 by %c1_i32 dim 1 : vector<8x384xf32>, i32 -> vector<8x384xf32>
    %14 = vector.extract_strided_slice %13 {offsets = [0, 0], sizes = [8, 256], strides = [1, 1]} : vector<8x384xf32> to vector<8x256xf32>
    %15 = arith.mulf %14, %3 : vector<8x256xf32>
    %c8 = arith.constant 8 : index
    %c0_12 = arith.constant 0 : index
    %16 = vector.load %arg6[%c8, %c0_12] : memref<200x256xf32, #tpu.memory_space<vmem>>, vector<8x256xf32>
    tpu.vector_store %arg6[%c8, %c0_12], %15 {strides = array<i32>} : memref<200x256xf32, #tpu.memory_space<vmem>>, vector<8x256xf32>,
    %17 = vector.extract_strided_slice %8 {offsets = [0, 0], sizes = [8, 256], strides = [1, 1]} : vector<8x384xf32> to vector<8x256xf32>
    %c16 = arith.constant 16 : index
    %c0_13 = arith.constant 0 : index
    %18 = vector.load %arg6[%c16, %c0_13] : memref<200x256xf32, #tpu.memory_space<vmem>>, vector<8x256xf32>
    tpu.vector_store %arg6[%c16, %c0_13], %17 {strides = array<i32>} : memref<200x256xf32, #tpu.memory_space<vmem>>, vector<8x256xf32>,
    %c383_i32 = arith.constant 383 : i32
    %19 = tpu.dynamic_rotate %8 by %c383_i32 dim 1 : vector<8x384xf32>, i32 -> vector<8x384xf32>
    %20 = vector.extract_strided_slice %19 {offsets = [0, 0], sizes = [8, 256], strides = [1, 1]} : vector<8x384xf32> to vector<8x256xf32>
    %21 = arith.mulf %20, %5 : vector<8x256xf32>
    %c24 = arith.constant 24 : index
    %c0_14 = arith.constant 0 : index
    %22 = vector.load %arg6[%c24, %c0_14] : memref<200x256xf32, #tpu.memory_space<vmem>>, vector<8x256xf32>
    tpu.vector_store %arg6[%c24, %c0_14], %21 {strides = array<i32>} : memref<200x256xf32, #tpu.memory_space<vmem>>, vector<8x256xf32>,
    %c382_i32 = arith.constant 382 : i32
    %23 = tpu.dynamic_rotate %8 by %c382_i32 dim 1 : vector<8x384xf32>, i32 -> vector<8x384xf32>
    %24 = vector.extract_strided_slice %23 {offsets = [0, 0], sizes = [8, 256], strides = [1, 1]} : vector<8x384xf32> to vector<8x256xf32>
    %25 = arith.mulf %24, %7 : vector<8x256xf32>
    %c32 = arith.constant 32 : index
    %c0_15 = arith.constant 0 : index
    %26 = vector.load %arg6[%c32, %c0_15] : memref<200x256xf32, #tpu.memory_space<vmem>>, vector<8x256xf32>
    tpu.vector_store %arg6[%c32, %c0_15], %25 {strides = array<i32>} : memref<200x256xf32, #tpu.memory_space<vmem>>, vector<8x256xf32>,
    %c370_i32 = arith.constant 370 : i32
    %27 = tpu.dynamic_rotate %8 by %c370_i32 dim 1 : vector<8x384xf32>, i32 -> vector<8x384xf32>
    %28 = vector.extract_strided_slice %27 {offsets = [0, 0], sizes = [8, 256], strides = [1, 1]} : vector<8x384xf32> to vector<8x256xf32>
    %29 = arith.mulf %28, %1 : vector<8x256xf32>
    %c40 = arith.constant 40 : index
    %c0_16 = arith.constant 0 : index
    %30 = vector.load %arg6[%c40, %c0_16] : memref<200x256xf32, #tpu.memory_space<vmem>>, vector<8x256xf32>
    tpu.vector_store %arg6[%c40, %c0_16], %29 {strides = array<i32>} : memref<200x256xf32, #tpu.memory_space<vmem>>, vector<8x256xf32>,
    %c369_i32 = arith.constant 369 : i32
    %31 = tpu.dynamic_rotate %8 by %c369_i32 dim 1 : vector<8x384xf32>, i32 -> vector<8x384xf32>
    %32 = vector.extract_strided_slice %31 {offsets = [0, 0], sizes = [8, 256], strides = [1, 1]} : vector<8x384xf32> to vector<8x256xf32>
    %33 = arith.mulf %32, %3 : vector<8x256xf32>
    %c48 = arith.constant 48 : index
    %c0_17 = arith.constant 0 : index
    %34 = vector.load %arg6[%c48, %c0_17] : memref<200x256xf32, #tpu.memory_space<vmem>>, vector<8x256xf32>
    tpu.vector_store %arg6[%c48, %c0_17], %33 {strides = array<i32>} : memref<200x256xf32, #tpu.memory_space<vmem>>, vector<8x256xf32>,
    %c368_i32 = arith.constant 368 : i32
    %35 = tpu.dynamic_rotate %8 by %c368_i32 dim 1 : vector<8x384xf32>, i32 -> vector<8x384xf32>
    %36 = vector.extract_strided_slice %35 {offsets = [0, 0], sizes = [8, 256], strides = [1, 1]} : vector<8x384xf32> to vector<8x256xf32>
    %c56 = arith.constant 56 : index
    %c0_18 = arith.constant 0 : index
    %37 = vector.load %arg6[%c56, %c0_18] : memref<200x256xf32, #tpu.memory_space<vmem>>, vector<8x256xf32>
    tpu.vector_store %arg6[%c56, %c0_18], %36 {strides = array<i32>} : memref<200x256xf32, #tpu.memory_space<vmem>>, vector<8x256xf32>,
    %c367_i32 = arith.constant 367 : i32
    %38 = tpu.dynamic_rotate %8 by %c367_i32 dim 1 : vector<8x384xf32>, i32 -> vector<8x384xf32>
    %39 = vector.extract_strided_slice %38 {offsets = [0, 0], sizes = [8, 256], strides = [1, 1]} : vector<8x384xf32> to vector<8x256xf32>
    %40 = arith.mulf %39, %5 : vector<8x256xf32>
    %c64 = arith.constant 64 : index
    %c0_19 = arith.constant 0 : index
    %41 = vector.load %arg6[%c64, %c0_19] : memref<200x256xf32, #tpu.memory_space<vmem>>, vector<8x256xf32>
    tpu.vector_store %arg6[%c64, %c0_19], %40 {strides = array<i32>} : memref<200x256xf32, #tpu.memory_space<vmem>>, vector<8x256xf32>,
    %c366_i32 = arith.constant 366 : i32
    %42 = tpu.dynamic_rotate %8 by %c366_i32 dim 1 : vector<8x384xf32>, i32 -> vector<8x384xf32>
    %43 = vector.extract_strided_slice %42 {offsets = [0, 0], sizes = [8, 256], strides = [1, 1]} : vector<8x384xf32> to vector<8x256xf32>
    %44 = arith.mulf %43, %7 : vector<8x256xf32>
    %c72 = arith.constant 72 : index
    %c0_20 = arith.constant 0 : index
    %45 = vector.load %arg6[%c72, %c0_20] : memref<200x256xf32, #tpu.memory_space<vmem>>, vector<8x256xf32>
    tpu.vector_store %arg6[%c72, %c0_20], %44 {strides = array<i32>} : memref<200x256xf32, #tpu.memory_space<vmem>>, vector<8x256xf32>,
    %c354_i32 = arith.constant 354 : i32
    %46 = tpu.dynamic_rotate %8 by %c354_i32 dim 1 : vector<8x384xf32>, i32 -> vector<8x384xf32>
    %47 = vector.extract_strided_slice %46 {offsets = [0, 0], sizes = [8, 256], strides = [1, 1]} : vector<8x384xf32> to vector<8x256xf32>
    %48 = arith.mulf %47, %1 : vector<8x256xf32>
    %c80 = arith.constant 80 : index
    %c0_21 = arith.constant 0 : index
    %49 = vector.load %arg6[%c80, %c0_21] : memref<200x256xf32, #tpu.memory_space<vmem>>, vector<8x256xf32>
    tpu.vector_store %arg6[%c80, %c0_21], %48 {strides = array<i32>} : memref<200x256xf32, #tpu.memory_space<vmem>>, vector<8x256xf32>,
    %c353_i32 = arith.constant 353 : i32
    %50 = tpu.dynamic_rotate %8 by %c353_i32 dim 1 : vector<8x384xf32>, i32 -> vector<8x384xf32>
    %51 = vector.extract_strided_slice %50 {offsets = [0, 0], sizes = [8, 256], strides = [1, 1]} : vector<8x384xf32> to vector<8x256xf32>
    %52 = arith.mulf %51, %3 : vector<8x256xf32>
    %c88 = arith.constant 88 : index
    %c0_22 = arith.constant 0 : index
    %53 = vector.load %arg6[%c88, %c0_22] : memref<200x256xf32, #tpu.memory_space<vmem>>, vector<8x256xf32>
    tpu.vector_store %arg6[%c88, %c0_22], %52 {strides = array<i32>} : memref<200x256xf32, #tpu.memory_space<vmem>>, vector<8x256xf32>,
    %c352_i32 = arith.constant 352 : i32
    %54 = tpu.dynamic_rotate %8 by %c352_i32 dim 1 : vector<8x384xf32>, i32 -> vector<8x384xf32>
    %55 = vector.extract_strided_slice %54 {offsets = [0, 0], sizes = [8, 256], strides = [1, 1]} : vector<8x384xf32> to vector<8x256xf32>
    %c96 = arith.constant 96 : index
    %c0_23 = arith.constant 0 : index
    %56 = vector.load %arg6[%c96, %c0_23] : memref<200x256xf32, #tpu.memory_space<vmem>>, vector<8x256xf32>
    tpu.vector_store %arg6[%c96, %c0_23], %55 {strides = array<i32>} : memref<200x256xf32, #tpu.memory_space<vmem>>, vector<8x256xf32>,
    %c351_i32 = arith.constant 351 : i32
    %57 = tpu.dynamic_rotate %8 by %c351_i32 dim 1 : vector<8x384xf32>, i32 -> vector<8x384xf32>
    %58 = vector.extract_strided_slice %57 {offsets = [0, 0], sizes = [8, 256], strides = [1, 1]} : vector<8x384xf32> to vector<8x256xf32>
    %59 = arith.mulf %58, %5 : vector<8x256xf32>
    %c104 = arith.constant 104 : index
    %c0_24 = arith.constant 0 : index
    %60 = vector.load %arg6[%c104, %c0_24] : memref<200x256xf32, #tpu.memory_space<vmem>>, vector<8x256xf32>
    tpu.vector_store %arg6[%c104, %c0_24], %59 {strides = array<i32>} : memref<200x256xf32, #tpu.memory_space<vmem>>, vector<8x256xf32>,
    %c350_i32 = arith.constant 350 : i32
    %61 = tpu.dynamic_rotate %8 by %c350_i32 dim 1 : vector<8x384xf32>, i32 -> vector<8x384xf32>
    %62 = vector.extract_strided_slice %61 {offsets = [0, 0], sizes = [8, 256], strides = [1, 1]} : vector<8x384xf32> to vector<8x256xf32>
    %63 = arith.mulf %62, %7 : vector<8x256xf32>
    %c112 = arith.constant 112 : index
    %c0_25 = arith.constant 0 : index
    %64 = vector.load %arg6[%c112, %c0_25] : memref<200x256xf32, #tpu.memory_space<vmem>>, vector<8x256xf32>
    tpu.vector_store %arg6[%c112, %c0_25], %63 {strides = array<i32>} : memref<200x256xf32, #tpu.memory_space<vmem>>, vector<8x256xf32>,
    %c338_i32 = arith.constant 338 : i32
    %65 = tpu.dynamic_rotate %8 by %c338_i32 dim 1 : vector<8x384xf32>, i32 -> vector<8x384xf32>
    %66 = vector.extract_strided_slice %65 {offsets = [0, 0], sizes = [8, 256], strides = [1, 1]} : vector<8x384xf32> to vector<8x256xf32>
    %67 = arith.mulf %66, %1 : vector<8x256xf32>
    %c120 = arith.constant 120 : index
    %c0_26 = arith.constant 0 : index
    %68 = vector.load %arg6[%c120, %c0_26] : memref<200x256xf32, #tpu.memory_space<vmem>>, vector<8x256xf32>
    tpu.vector_store %arg6[%c120, %c0_26], %67 {strides = array<i32>} : memref<200x256xf32, #tpu.memory_space<vmem>>, vector<8x256xf32>,
    %c337_i32 = arith.constant 337 : i32
    %69 = tpu.dynamic_rotate %8 by %c337_i32 dim 1 : vector<8x384xf32>, i32 -> vector<8x384xf32>
    %70 = vector.extract_strided_slice %69 {offsets = [0, 0], sizes = [8, 256], strides = [1, 1]} : vector<8x384xf32> to vector<8x256xf32>
    %71 = arith.mulf %70, %3 : vector<8x256xf32>
    %c128 = arith.constant 128 : index
    %c0_27 = arith.constant 0 : index
    %72 = vector.load %arg6[%c128, %c0_27] : memref<200x256xf32, #tpu.memory_space<vmem>>, vector<8x256xf32>
    tpu.vector_store %arg6[%c128, %c0_27], %71 {strides = array<i32>} : memref<200x256xf32, #tpu.memory_space<vmem>>, vector<8x256xf32>,
    %c336_i32 = arith.constant 336 : i32
    %73 = tpu.dynamic_rotate %8 by %c336_i32 dim 1 : vector<8x384xf32>, i32 -> vector<8x384xf32>
    %74 = vector.extract_strided_slice %73 {offsets = [0, 0], sizes = [8, 256], strides = [1, 1]} : vector<8x384xf32> to vector<8x256xf32>
    %c136 = arith.constant 136 : index
    %c0_28 = arith.constant 0 : index
    %75 = vector.load %arg6[%c136, %c0_28] : memref<200x256xf32, #tpu.memory_space<vmem>>, vector<8x256xf32>
    tpu.vector_store %arg6[%c136, %c0_28], %74 {strides = array<i32>} : memref<200x256xf32, #tpu.memory_space<vmem>>, vector<8x256xf32>,
    %c335_i32 = arith.constant 335 : i32
    %76 = tpu.dynamic_rotate %8 by %c335_i32 dim 1 : vector<8x384xf32>, i32 -> vector<8x384xf32>
    %77 = vector.extract_strided_slice %76 {offsets = [0, 0], sizes = [8, 256], strides = [1, 1]} : vector<8x384xf32> to vector<8x256xf32>
    %78 = arith.mulf %77, %5 : vector<8x256xf32>
    %c144 = arith.constant 144 : index
    %c0_29 = arith.constant 0 : index
    %79 = vector.load %arg6[%c144, %c0_29] : memref<200x256xf32, #tpu.memory_space<vmem>>, vector<8x256xf32>
    tpu.vector_store %arg6[%c144, %c0_29], %78 {strides = array<i32>} : memref<200x256xf32, #tpu.memory_space<vmem>>, vector<8x256xf32>,
    %c334_i32 = arith.constant 334 : i32
    %80 = tpu.dynamic_rotate %8 by %c334_i32 dim 1 : vector<8x384xf32>, i32 -> vector<8x384xf32>
    %81 = vector.extract_strided_slice %80 {offsets = [0, 0], sizes = [8, 256], strides = [1, 1]} : vector<8x384xf32> to vector<8x256xf32>
    %82 = arith.mulf %81, %7 : vector<8x256xf32>
    %c152 = arith.constant 152 : index
    %c0_30 = arith.constant 0 : index
    %83 = vector.load %arg6[%c152, %c0_30] : memref<200x256xf32, #tpu.memory_space<vmem>>, vector<8x256xf32>
    tpu.vector_store %arg6[%c152, %c0_30], %82 {strides = array<i32>} : memref<200x256xf32, #tpu.memory_space<vmem>>, vector<8x256xf32>,
    %c322_i32 = arith.constant 322 : i32
    %84 = tpu.dynamic_rotate %8 by %c322_i32 dim 1 : vector<8x384xf32>, i32 -> vector<8x384xf32>
    %85 = vector.extract_strided_slice %84 {offsets = [0, 0], sizes = [8, 256], strides = [1, 1]} : vector<8x384xf32> to vector<8x256xf32>
    %86 = arith.mulf %85, %1 : vector<8x256xf32>
    %c160 = arith.constant 160 : index
    %c0_31 = arith.constant 0 : index
    %87 = vector.load %arg6[%c160, %c0_31] : memref<200x256xf32, #tpu.memory_space<vmem>>, vector<8x256xf32>
    tpu.vector_store %arg6[%c160, %c0_31], %86 {strides = array<i32>} : memref<200x256xf32, #tpu.memory_space<vmem>>, vector<8x256xf32>,
    %c321_i32 = arith.constant 321 : i32
    %88 = tpu.dynamic_rotate %8 by %c321_i32 dim 1 : vector<8x384xf32>, i32 -> vector<8x384xf32>
    %89 = vector.extract_strided_slice %88 {offsets = [0, 0], sizes = [8, 256], strides = [1, 1]} : vector<8x384xf32> to vector<8x256xf32>
    %90 = arith.mulf %89, %3 : vector<8x256xf32>
    %c168 = arith.constant 168 : index
    %c0_32 = arith.constant 0 : index
    %91 = vector.load %arg6[%c168, %c0_32] : memref<200x256xf32, #tpu.memory_space<vmem>>, vector<8x256xf32>
    tpu.vector_store %arg6[%c168, %c0_32], %90 {strides = array<i32>} : memref<200x256xf32, #tpu.memory_space<vmem>>, vector<8x256xf32>,
    %c320_i32 = arith.constant 320 : i32
    %92 = tpu.dynamic_rotate %8 by %c320_i32 dim 1 : vector<8x384xf32>, i32 -> vector<8x384xf32>
    %93 = vector.extract_strided_slice %92 {offsets = [0, 0], sizes = [8, 256], strides = [1, 1]} : vector<8x384xf32> to vector<8x256xf32>
    %c176 = arith.constant 176 : index
    %c0_33 = arith.constant 0 : index
    %94 = vector.load %arg6[%c176, %c0_33] : memref<200x256xf32, #tpu.memory_space<vmem>>, vector<8x256xf32>
    tpu.vector_store %arg6[%c176, %c0_33], %93 {strides = array<i32>} : memref<200x256xf32, #tpu.memory_space<vmem>>, vector<8x256xf32>,
    %c319_i32 = arith.constant 319 : i32
    %95 = tpu.dynamic_rotate %8 by %c319_i32 dim 1 : vector<8x384xf32>, i32 -> vector<8x384xf32>
    %96 = vector.extract_strided_slice %95 {offsets = [0, 0], sizes = [8, 256], strides = [1, 1]} : vector<8x384xf32> to vector<8x256xf32>
    %97 = arith.mulf %96, %5 : vector<8x256xf32>
    %c184 = arith.constant 184 : index
    %c0_34 = arith.constant 0 : index
    %98 = vector.load %arg6[%c184, %c0_34] : memref<200x256xf32, #tpu.memory_space<vmem>>, vector<8x256xf32>
    tpu.vector_store %arg6[%c184, %c0_34], %97 {strides = array<i32>} : memref<200x256xf32, #tpu.memory_space<vmem>>, vector<8x256xf32>,
    %c318_i32 = arith.constant 318 : i32
    %99 = tpu.dynamic_rotate %8 by %c318_i32 dim 1 : vector<8x384xf32>, i32 -> vector<8x384xf32>
    %100 = vector.extract_strided_slice %99 {offsets = [0, 0], sizes = [8, 256], strides = [1, 1]} : vector<8x384xf32> to vector<8x256xf32>
    %101 = arith.mulf %100, %7 : vector<8x256xf32>
    %c192 = arith.constant 192 : index
    %c0_35 = arith.constant 0 : index
    %102 = vector.load %arg6[%c192, %c0_35] : memref<200x256xf32, #tpu.memory_space<vmem>>, vector<8x256xf32>
    tpu.vector_store %arg6[%c192, %c0_35], %101 {strides = array<i32>} : memref<200x256xf32, #tpu.memory_space<vmem>>, vector<8x256xf32>,
    %c0_36 = arith.constant 0 : index
    %c0_37 = arith.constant 0 : index
    %103 = vector.load %arg2[%c0_36, %c0_37] : memref<12x200xf32, #tpu.memory_space<vmem>>, vector<12x200xf32>
    %c0_38 = arith.constant 0 : index
    %c0_39 = arith.constant 0 : index
    %104 = vector.load %arg6[%c0_38, %c0_39] : memref<200x256xf32, #tpu.memory_space<vmem>>, vector<200x256xf32>
    %cst = arith.constant dense<0.000000e+00> : vector<12x256xf32>
    %105 = tpu.matmul %103, %104, %cst {dimension_numbers = #tpu.dot_dimension_numbers<[1], [0], [0], [1], [0, 0, 1, 1], [], []>} : vector<12x200xf32>, vector<200x256xf32>, vector<12x256xf32> -> vector<12x256xf32>
    %c0_40 = arith.constant 0 : index
    %c0_41 = arith.constant 0 : index
    %106 = vector.load %arg3[%c0_40, %c0_41] : memref<12x1xf32, #tpu.memory_space<vmem>>, vector<12x1xf32>
    %107 = vector.broadcast %106 : vector<12x1xf32> to vector<12x256xf32>
    %108 = arith.addf %105, %107 : vector<12x256xf32>
    %c0_42 = arith.constant 0 : index
    %c0_43 = arith.constant 0 : index
    %109 = vector.load %arg5[%c0_42, %c0_43] : memref<12x256xf32, #tpu.memory_space<vmem>>, vector<12x256xf32>
    tpu.vector_store %arg5[%c0_42, %c0_43], %108 {strides = array<i32>} : memref<12x256xf32, #tpu.memory_space<vmem>>, vector<12x256xf32>,
    return
  }
  func.func @transform_0(%arg0: i32) -> (i32, i32) {
    %c0_i32 = arith.constant 0 : i32
    %c0_i32_0 = arith.constant 0 : i32
    return %c0_i32, %arg0 : i32, i32
  }
  func.func @transform_1(%arg0: i32) -> (i32, i32) {
    %c0_i32 = arith.constant 0 : i32
    %c0_i32_0 = arith.constant 0 : i32
    %c0_i32_1 = arith.constant 0 : i32
    return %c0_i32, %c0_i32_0 : i32, i32
  }
  func.func @transform_2(%arg0: i32) -> (i32, i32) {
    %c0_i32 = arith.constant 0 : i32
    %c0_i32_0 = arith.constant 0 : i32
    %c0_i32_1 = arith.constant 0 : i32
    return %c0_i32, %c0_i32_0 : i32, i32
  }
  func.func @transform_3(%arg0: i32) -> (i32, i32, i32) {
    %c0_i32 = arith.constant 0 : i32
    %c0_i32_0 = arith.constant 0 : i32
    %c0_i32_1 = arith.constant 0 : i32
    %c0_i32_2 = arith.constant 0 : i32
    return %c0_i32, %c0_i32_0, %c0_i32_1 : i32, i32, i32
  }
  func.func @transform_4(%arg0: i32) -> (i32, i32) {
    %c0_i32 = arith.constant 0 : i32
    %c0_i32_0 = arith.constant 0 : i32
    return %c0_i32, %arg0 : i32, i32
  }
}

</mosaic_0001>

<llo_original>
// kernel: tile.0
$region0: #{tile.0}
  %s0 = inlined_call_operand.vmem [shape: f32[4,3], index: 0, kind: input, shape index: {}]
  %s1 = inlined_call_operand.vmem [shape: f32[12,1], index: 1, kind: output, shape index: {}]
  $region1: #{tile.0} parent=0
    #allocation0 [shape = 'u8[4096]{0}', space=vmem, size = 0x1000, scoped, tag = 'scoped mem for input reshape']
    %s3 = sshll.u32 1, 4
    %s4 = ssub.s32 %s3, 1
    %v5 = vld [vmem:[%s0] sm:%s4]
    %6 = vst [vmem:[#allocation0] sm:%s4] %v5
    %v7 = vld [vmem:[#allocation0] sm:$0xf]
    %vm8 = vcmask 7168
    %9 = vst.msk [vmem:[%s1] ss:$3 sm:$0xf] %vm8, %v7
    %v10 = vld [vmem:[#allocation0] sm:$0xf]
    %11 = vrot.lane.b32.xlu0 %v10, 127
    %v12 = vpop.permute.xlu0 %11
    %vm13 = vcmask 7168
    %s14 = scalar_lea.vmem %s1, 1
    %15 = vst.msk [vmem:[%s14] ss:$3 sm:$0xf] %vm13, %v12
    %v16 = vld [vmem:[#allocation0] sm:$0xf]
    %17 = vrot.lane.b32.xlu0 %v16, 126
    %v18 = vpop.permute.xlu0 %17
    %vm19 = vcmask 7168
    %s20 = scalar_lea.vmem %s1, 2
    %21 = vst.msk [vmem:[%s20] ss:$3 sm:$0xf] %vm19, %v18

// kernel: tile.8
$region0: #{tile.8}
  #allocation2 [shape = 's32[1]{0}', space=sflag, size = 0x4, scoped, tag = 'scoped memory for tile.8']
  %s0 = inlined_call_operand.hbm [shape: f32[3], index: 0, kind: input, shape index: {}]
  %s1 = inlined_call_operand.vmem [shape: f32[4,3], index: 1, kind: output, shape index: {}]
  $region1: #{tile.8} parent=0
    #allocation0 [shape = 'u8[512]{0}', space=vmem, size = 0x400, scoped, tag = 'operand span for operand 0']
    #allocation1 [shape = 's32[1]{0}', space=sflag, size = 0x4, scoped, tag = 'scoped memory for tile.8']
    %2 = vsyncpa [#allocation1], 0
    // Predicated region
    $region2: #{tile.8} parent=1 // pred_check
      _
    $region3: #{tile.8} parent=1 // pred_check_branch
      %4 = sbr.rel (0) target = $region5
    $region4: #{tile.8} parent=1 // pred_region
      %s6 = ssub.s32 16, 16
      %7 = vsyncadd [#allocation1], %s6
      %s9 = sshll.u32 [#allocation0], 4
      %s10 = int_to_ptr.vmem [resolvable:$true] %s9
      %12 = dma.hbm_to_vmem [thread:$0]  %s0, 16, %s10, [#allocation1]
    $region5: #{tile.8} parent=1 // pred_fallthru
      _
    // Predicated region
    $region6: #{tile.8} parent=1 // pred_check
      _
    $region7: #{tile.8} parent=1 // pred_check_branch
      %14 = sbr.rel (0) target = $region9
    $region8: #{tile.8} parent=1 // pred_region
      %15 = dma.done [#allocation1], 16
    $region9: #{tile.8} parent=1 // pred_fallthru
      _
    %v16 = vld [vmem:[#allocation0] ss:$0 sm:$0xff]
    %17 = vst [vmem:[%s1] sm:$0xf] %v16
    %18 = vsyncpa [#allocation1], 1

// kernel: transp_conv_forward.1
$region0: #{transp_conv_forward.1}
  #allocation0 [shape = 'u32[]', space=smem, size = 0x4, offset = 0x4, fixed_abs, tag = 'smem constant byte address 0x4 - core index']
  #allocation1 [shape = 'u32[144,128]{1,0:T(1,128)}', space=vmem, size = 0x12000, scoped, tag = 'internal scratch']
  #allocation2 [shape = 'f32[200,256]{1,0:T(8,128)}', space=vmem, size = 0x32000, scoped, tag = 'scratch operand']
  %s0 = inlined_call_operand.vmem [shape: f32[8,768], index: 0, kind: input, shape index: {}]
  %s1 = inlined_call_operand.vmem [shape: f32[12,200], index: 1, kind: input, shape index: {}]
  %s2 = inlined_call_operand.vmem [shape: f32[12,1], index: 2, kind: input, shape index: {}]
  %s3 = inlined_call_operand.vmem [shape: f32[5,8,256], index: 3, kind: input, shape index: {}]
  %s4 = inlined_call_operand.vmem [shape: f32[12,512], index: 4, kind: output, shape index: {}]
  %s5 = sld [smem:[#allocation0]]
  $region68: #{transp_conv_forward.1} parent=0
    _
  %s7 = ssub.s32 1, %s5
  %s8 = scalar_select 0, %s7, %s5
  $region1: #{transp_conv_forward.1} parent=0
    #allocation3 [shape = 'u8[32768]{0}', space=vmem, size = 0x8000, scoped, tag = 'output window, operand 0']
    loop: start=0, step=1, limit=4
    $region2: #{transp_conv_forward.1} parent=1 // loop_pre_header
      _
    $region3: #{transp_conv_forward.1} parent=1 // loop_header
      %s10 = sphi 0, %s14
      %p11 = scmp.ge.s32.totalorder %s10, 4
      %s20 = sphi 0, %s22
      %s23 = sphi 0, %s20
      %s24 = sphi 0, %s23
      %s40 = sphi 0, %s24
      %s44 = sphi 0, %s44
      %s46 = sphi 0, %s44
      %s47 = sphi 0, %s46
      %s61 = sphi 0, %s47
      %s65 = sphi 0, %s65
      %s67 = sphi 0, %s65
      %s68 = sphi 0, %s67
      %s82 = sphi 0, %s68
      %s86 = sphi 0, %s86
      %s88 = sphi 0, %s86
      %s89 = sphi 0, %s88
      %s103 = sphi 0, %s89
      %s109 = sphi 0, %s111
      %s112 = sphi 0, %s109
      %s113 = sphi 0, %s112
      %s129 = sphi 0, %s113
    $region4: #{transp_conv_forward.1} parent=1 // loop_header_branch
      %13 = sbr.rel (%p11) target = $region8
    $region5: #{transp_conv_forward.1} parent=1 // loop_body
      %s15 = ssub.s32 %s10, 1
      %s16 = ssub.s32 %s10, 2
      %s17 = sadd.s32 %s10, 1
      %s18 = ssub.s32 %s10, %s17
      %p19 = scmp.eq.s32.totalorder %s18, 0
      %s21 = sadd.s32 %s20, 1
      %s22 = scalar_select %p19, %s20, %s21
      %p25 = pneg %p19
      %p26 = scmp.eq.s32.totalorder %s10, 1
      %p27 = por %p25, %p26
      %p28 = scmp.ne.s32.totalorder %s20, %s23
      %p29 = scmp.eq.s32.totalorder %s10, 0
      %p30 = por %p28, %p29
      %p31 = scmp.ne.s32.totalorder %s20, %s23
      %p32 = scmp.eq.s32.totalorder %s15, 1
      %p33 = por %p31, %p32
      %p34 = scmp.ne.s32.totalorder %s23, %s24
      %p35 = scmp.eq.s32.totalorder %s15, 0
      %p36 = por %p34, %p35
      %p37 = scmp.ne.s32.totalorder %s23, %s24
      %p38 = scmp.eq.s32.totalorder %s16, 1
      %p39 = por %p37, %p38
      %p41 = scmp.ne.s32.totalorder %s24, %s40
      %p42 = scmp.eq.s32.totalorder %s16, 0
      %p43 = por %p41, %p42
      %s45 = sadd.s32 %s44, 1
      %p48 = scmp.eq.s32.totalorder %s10, 1
      %p49 = scmp.ne.s32.totalorder %s44, %s46
      %p50 = scmp.eq.s32.totalorder %s10, 0
      %p51 = por %p49, %p50
      %p52 = scmp.ne.s32.totalorder %s44, %s46
      %p53 = scmp.eq.s32.totalorder %s15, 1
      %p54 = por %p52, %p53
      %p55 = scmp.ne.s32.totalorder %s46, %s47
      %p56 = scmp.eq.s32.totalorder %s15, 0
      %p57 = por %p55, %p56
      %p58 = scmp.ne.s32.totalorder %s46, %s47
      %p59 = scmp.eq.s32.totalorder %s16, 1
      %p60 = por %p58, %p59
      %p62 = scmp.ne.s32.totalorder %s47, %s61
      %p63 = scmp.eq.s32.totalorder %s16, 0
      %p64 = por %p62, %p63
      %s66 = sadd.s32 %s65, 1
      %p69 = scmp.eq.s32.totalorder %s10, 1
      %p70 = scmp.ne.s32.totalorder %s65, %s67
      %p71 = scmp.eq.s32.totalorder %s10, 0
      %p72 = por %p70, %p71
      %p73 = scmp.ne.s32.totalorder %s65, %s67
      %p74 = scmp.eq.s32.totalorder %s15, 1
      %p75 = por %p73, %p74
      %p76 = scmp.ne.s32.totalorder %s67, %s68
      %p77 = scmp.eq.s32.totalorder %s15, 0
      %p78 = por %p76, %p77
      %p79 = scmp.ne.s32.totalorder %s67, %s68
      %p80 = scmp.eq.s32.totalorder %s16, 1
      %p81 = por %p79, %p80
      %p83 = scmp.ne.s32.totalorder %s68, %s82
      %p84 = scmp.eq.s32.totalorder %s16, 0
      %p85 = por %p83, %p84
      %s87 = sadd.s32 %s86, 1
      %p90 = scmp.eq.s32.totalorder %s10, 1
      %p91 = scmp.ne.s32.totalorder %s86, %s88
      %p92 = scmp.eq.s32.totalorder %s10, 0
      %p93 = por %p91, %p92
      %p94 = scmp.ne.s32.totalorder %s86, %s88
      %p95 = scmp.eq.s32.totalorder %s15, 1
      %p96 = por %p94, %p95
      %p97 = scmp.ne.s32.totalorder %s88, %s89
      %p98 = scmp.eq.s32.totalorder %s15, 0
      %p99 = por %p97, %p98
      %p100 = scmp.ne.s32.totalorder %s88, %s89
      %p101 = scmp.eq.s32.totalorder %s16, 1
      %p102 = por %p100, %p101
      %p104 = scmp.ne.s32.totalorder %s89, %s103
      %p105 = scmp.eq.s32.totalorder %s16, 0
      %p106 = por %p104, %p105
      %s107 = ssub.s32 %s10, %s17
      %p108 = scmp.eq.s32.totalorder %s107, 0
      %s110 = sadd.s32 %s109, 1
      %s111 = scalar_select %p108, %s109, %s110
      %p114 = pneg %p108
      %p115 = scmp.eq.s32.totalorder %s10, 1
      %p116 = por %p114, %p115
      %p117 = scmp.ne.s32.totalorder %s109, %s112
      %p118 = scmp.eq.s32.totalorder %s10, 0
      %p119 = por %p117, %p118
      %p120 = scmp.ne.s32.totalorder %s109, %s112
      %p121 = scmp.eq.s32.totalorder %s15, 1
      %p122 = por %p120, %p121
      %p123 = scmp.ne.s32.totalorder %s112, %s113
      %p124 = scmp.eq.s32.totalorder %s15, 0
      %p125 = por %p123, %p124
      %p126 = scmp.ne.s32.totalorder %s112, %s113
      %p127 = scmp.eq.s32.totalorder %s16, 1
      %p128 = por %p126, %p127
      %p130 = scmp.ne.s32.totalorder %s113, %s129
      %p131 = scmp.eq.s32.totalorder %s16, 0
      %p132 = por %p130, %p131
      %p133 = scmp.le.s32.totalorder 1, %s10
      %p134 = scmp.lt.s32.totalorder %s10, 3
      %p135 = pnand %p133, %p134
      %p136 = pneg %p135
      // Predicated region
      $region9: #{transp_conv_forward.1} parent=5 // pred_check
        _
      $region10: #{transp_conv_forward.1} parent=5 // pred_check_branch
        %138 = sbr.rel (%p135) target = $region12
      $region11: #{transp_conv_forward.1} parent=5 // pred_region
        %s139 = ssub.s32 %s10, 1
        // Predicated region
        $region13: #{transp_conv_forward.1} parent=11 // pred_check
          %p140 = pneg %p57
        $region14: #{transp_conv_forward.1} parent=11 // pred_check_branch
          %142 = sbr.rel (%p140) target = $region16
        $region15: #{transp_conv_forward.1} parent=11 // pred_region
          _
        $region16: #{transp_conv_forward.1} parent=11 // pred_fallthru
          _
        // Predicated region
        $region17: #{transp_conv_forward.1} parent=11 // pred_check
          %p143 = pneg %p78
        $region18: #{transp_conv_forward.1} parent=11 // pred_check_branch
          %145 = sbr.rel (%p143) target = $region20
        $region19: #{transp_conv_forward.1} parent=11 // pred_region
          _
        $region20: #{transp_conv_forward.1} parent=11 // pred_fallthru
          _
        // Predicated region
        $region21: #{transp_conv_forward.1} parent=11 // pred_check
          %p146 = pneg %p99
        $region22: #{transp_conv_forward.1} parent=11 // pred_check_branch
          %148 = sbr.rel (%p146) target = $region24
        $region23: #{transp_conv_forward.1} parent=11 // pred_region
          _
        $region24: #{transp_conv_forward.1} parent=11 // pred_fallthru
          _
      $region12: #{transp_conv_forward.1} parent=5 // pred_fallthru
        _
      %p149 = scmp.lt.s32.totalorder %s10, 2
      // Predicated region
      $region25: #{transp_conv_forward.1} parent=5 // pred_check
        %p150 = pneg %p149
      $region26: #{transp_conv_forward.1} parent=5 // pred_check_branch
        %152 = sbr.rel (%p150) target = $region28
      $region27: #{transp_conv_forward.1} parent=5 // pred_region
        // Predicated region
        $region29: #{transp_conv_forward.1} parent=27 // pred_check
          %p153 = pneg %p30
        $region30: #{transp_conv_forward.1} parent=27 // pred_check_branch
          %155 = sbr.rel (%p153) target = $region32
        $region31: #{transp_conv_forward.1} parent=27 // pred_region
          %s156 = smul.u32 3, %s10
          %p157 = scmp.lt.s32.totalorder %s156, 5
          %s158 = scalar_select %p157, %s156, 5
          %s159 = smul.addr %s158, 8
          %s160 = scalar_lea.vmem %s0, %s159
          %s161 = smul.u32 3, %s10
        $region32: #{transp_conv_forward.1} parent=27 // pred_fallthru
          _
      $region28: #{transp_conv_forward.1} parent=5 // pred_fallthru
        _
      %p162 = scmp.le.s32.totalorder 1, %s10
      %p163 = scmp.lt.s32.totalorder %s10, 3
      %p164 = pnand %p162, %p163
      %p165 = pneg %p164
      // Predicated region
      $region33: #{transp_conv_forward.1} parent=5 // pred_check
        _
      $region34: #{transp_conv_forward.1} parent=5 // pred_check_branch
        %167 = sbr.rel (%p164) target = $region36
      $region35: #{transp_conv_forward.1} parent=5 // pred_region
        %s168 = ssub.s32 %s10, 1
        %s169 = smul.u32 3, %s15
        %p170 = scmp.lt.s32.totalorder %s169, 5
        %s171 = scalar_select %p170, %s169, 5
        %s172 = smul.addr %s171, 8
        %s173 = scalar_lea.vmem %s0, %s172
        %p174 = pneg %p36
        %p175 = pneg %p33
        %p176 = pneg %p57
        %p177 = pneg %p54
        %p178 = pneg %p78
        %p179 = pneg %p75
        %p180 = pneg %p99
        %p181 = pneg %p96
        %p182 = pneg %p125
        %p183 = pneg %p122
        %s184 = sand.u32 %s112, 1
        %s185 = sand.u32 %s112, 1
        %s186 = smul.addr %s185, 32
        %s187 = scalar_lea.vmem [#allocation3], %s186
        %s188 = smul.u32 3, %s15
        %p189 = scmp.lt.s32.totalorder %s188, 5
        %s190 = scalar_select %p189, %s188, 5
        %s191 = smul.addr %s190, 8
        %s192 = scalar_lea.vmem %s0, %s191
        %s193 = smul.u32 3, %s15
        %s194 = smul.u32 2, %s15
        %v195 = vld [vmem:[%s3] sm:$0xff]
        %v196 = vld [vmem:[%s3 + $0x8] sm:$0xff]
        %s197 = scalar_lea.vmem %s3, 16
        %v198 = vld [vmem:[%s197] sm:$0xff]
        %v199 = vld [vmem:[%s197 + $0x8] sm:$0xff]
        %s200 = scalar_lea.vmem %s3, 48
        %v201 = vld [vmem:[%s200] sm:$0xff]
        %v202 = vld [vmem:[%s200 + $0x8] sm:$0xff]
        %s203 = scalar_lea.vmem %s3, 64
        %v204 = vld [vmem:[%s203] sm:$0xff]
        %v205 = vld [vmem:[%s203 + $0x8] sm:$0xff]
        %v206 = vld [vmem:[%s192] sm:$0xff]
        %v207 = vld [vmem:[%s192 + $0x8] sm:$0xff]
        %v208 = vld [vmem:[%s192 + $0x10] sm:$0xff]
        %209 = vrot.lane.b32.xlu0 %v206, 2
        %v210 = vpop.permute.xlu0 %209
        %211 = vrot.lane.b32.xlu0 %v207, 2
        %v212 = vpop.permute.xlu0 %211
        %213 = vrot.lane.b32.xlu0 %v208, 2
        %v214 = vpop.permute.xlu0 %213
        %v215 = vlaneseq
        %v216 = vand.u32 %v215, 127
        %vm217 = vcmp.lt.s32.totalorder %v216, 2
        %v218 = vsel %vm217, %v210, %v212
        %v219 = vsel %vm217, %v214, %v210
        %v220 = vmul.f32 %v219, %v195
        %v221 = vmul.f32 %v218, %v196
        %222 = vst [vmem:[#allocation2] sm:$0xff] %v220
        %223 = vst [vmem:[#allocation2 + $0x8] sm:$0xff] %v221
        %224 = vrot.lane.b32.xlu0 %v206, 1
        %v225 = vpop.permute.xlu0 %224
        %226 = vrot.lane.b32.xlu0 %v207, 1
        %v227 = vpop.permute.xlu0 %226
        %228 = vrot.lane.b32.xlu0 %v208, 1
        %v229 = vpop.permute.xlu0 %228
        %vm230 = vcmp.lt.s32.totalorder %v216, 1
        %v231 = vsel %vm230, %v225, %v227
        %v232 = vsel %vm230, %v229, %v225
        %v233 = vmul.f32 %v232, %v198
        %v234 = vmul.f32 %v231, %v199
        %235 = vst [vmem:[#allocation2 + $0x10] sm:$0xff] %v233
        %236 = vst [vmem:[#allocation2 + $0x18] sm:$0xff] %v234
        %237 = vst [vmem:[#allocation2 + $0x20] sm:$0xff] %v206
        %238 = vst [vmem:[#allocation2 + $0x28] sm:$0xff] %v207
        %239 = vrot.lane.b32.xlu0 %v206, 127
        %v240 = vpop.permute.xlu0 %239
        %241 = vrot.lane.b32.xlu0 %v207, 127
        %v242 = vpop.permute.xlu0 %241
        %243 = vrot.lane.b32.xlu0 %v208, 127
        %v244 = vpop.permute.xlu0 %243
        %vm245 = vcmp.lt.s32.totalorder %v216, 127
        %v246 = vsel %vm245, %v242, %v244
        %v247 = vsel %vm245, %v240, %v242
        %v248 = vmul.f32 %v247, %v201
        %v249 = vmul.f32 %v246, %v202
        %250 = vst [vmem:[#allocation2 + $0x30] sm:$0xff] %v248
        %251 = vst [vmem:[#allocation2 + $0x38] sm:$0xff] %v249
        %252 = vrot.lane.b32.xlu0 %v206, 126
        %v253 = vpop.permute.xlu0 %252
        %254 = vrot.lane.b32.xlu0 %v207, 126
        %v255 = vpop.permute.xlu0 %254
        %256 = vrot.lane.b32.xlu0 %v208, 126
        %v257 = vpop.permute.xlu0 %256
        %vm258 = vcmp.lt.s32.totalorder %v216, 126
        %v259 = vsel %vm258, %v255, %v257
        %v260 = vsel %vm258, %v253, %v255
        %v261 = vmul.f32 %v260, %v204
        %v262 = vmul.f32 %v259, %v205
        %263 = vst [vmem:[#allocation2 + $0x40] sm:$0xff] %v261
        %264 = vst [vmem:[#allocation2 + $0x48] sm:$0xff] %v262
        %265 = vrot.lane.b32.xlu0 %v206, 114
        %v266 = vpop.permute.xlu0 %265
        %267 = vrot.lane.b32.xlu0 %v207, 114
        %v268 = vpop.permute.xlu0 %267
        %269 = vrot.lane.b32.xlu0 %v208, 114
        %v270 = vpop.permute.xlu0 %269
        %vm271 = vcmp.lt.s32.totalorder %v216, 114
        %v272 = vsel %vm271, %v268, %v270
        %v273 = vsel %vm271, %v266, %v268
        %v274 = vmul.f32 %v273, %v195
        %v275 = vmul.f32 %v272, %v196
        %276 = vst [vmem:[#allocation2 + $0x50] sm:$0xff] %v274
        %277 = vst [vmem:[#allocation2 + $0x58] sm:$0xff] %v275
        %278 = vrot.lane.b32.xlu0 %v206, 113
        %v279 = vpop.permute.xlu0 %278
        %280 = vrot.lane.b32.xlu0 %v207, 113
        %v281 = vpop.permute.xlu0 %280
        %282 = vrot.lane.b32.xlu0 %v208, 113
        %v283 = vpop.permute.xlu0 %282
        %vm284 = vcmp.lt.s32.totalorder %v216, 113
        %v285 = vsel %vm284, %v281, %v283
        %v286 = vsel %vm284, %v279, %v281
        %v287 = vmul.f32 %v286, %v198
        %v288 = vmul.f32 %v285, %v199
        %289 = vst [vmem:[#allocation2 + $0x60] sm:$0xff] %v287
        %290 = vst [vmem:[#allocation2 + $0x68] sm:$0xff] %v288
        %291 = vrot.lane.b32.xlu0 %v206, 112
        %v292 = vpop.permute.xlu0 %291
        %293 = vrot.lane.b32.xlu0 %v207, 112
        %v294 = vpop.permute.xlu0 %293
        %295 = vrot.lane.b32.xlu0 %v208, 112
        %v296 = vpop.permute.xlu0 %295
        %vm297 = vcmp.lt.s32.totalorder %v216, 112
        %v298 = vsel %vm297, %v294, %v296
        %v299 = vsel %vm297, %v292, %v294
        %300 = vst [vmem:[#allocation2 + $0x70] sm:$0xff] %v299
        %301 = vst [vmem:[#allocation2 + $0x78] sm:$0xff] %v298
        %302 = vrot.lane.b32.xlu0 %v206, 111
        %v303 = vpop.permute.xlu0 %302
        %304 = vrot.lane.b32.xlu0 %v207, 111
        %v305 = vpop.permute.xlu0 %304
        %306 = vrot.lane.b32.xlu0 %v208, 111
        %v307 = vpop.permute.xlu0 %306
        %vm308 = vcmp.lt.s32.totalorder %v216, 111
        %v309 = vsel %vm308, %v305, %v307
        %v310 = vsel %vm308, %v303, %v305
        %v311 = vmul.f32 %v310, %v201
        %v312 = vmul.f32 %v309, %v202
        %313 = vst [vmem:[#allocation2 + $0x80] sm:$0xff] %v311
        %314 = vst [vmem:[#allocation2 + $0x88] sm:$0xff] %v312
        %315 = vrot.lane.b32.xlu0 %v206, 110
        %v316 = vpop.permute.xlu0 %315
        %317 = vrot.lane.b32.xlu0 %v207, 110
        %v318 = vpop.permute.xlu0 %317
        %319 = vrot.lane.b32.xlu0 %v208, 110
        %v320 = vpop.permute.xlu0 %319
        %vm321 = vcmp.lt.s32.totalorder %v216, 110
        %v322 = vsel %vm321, %v318, %v320
        %v323 = vsel %vm321, %v316, %v318
        %v324 = vmul.f32 %v323, %v204
        %v325 = vmul.f32 %v322, %v205
        %326 = vst [vmem:[#allocation2 + $0x90] sm:$0xff] %v324
        %327 = vst [vmem:[#allocation2 + $0x98] sm:$0xff] %v325
        %328 = vrot.lane.b32.xlu0 %v206, 98
        %v329 = vpop.permute.xlu0 %328
        %330 = vrot.lane.b32.xlu0 %v207, 98
        %v331 = vpop.permute.xlu0 %330
        %332 = vrot.lane.b32.xlu0 %v208, 98
        %v333 = vpop.permute.xlu0 %332
        %vm334 = vcmp.lt.s32.totalorder %v216, 98
        %v335 = vsel %vm334, %v331, %v333
        %v336 = vsel %vm334, %v329, %v331
        %v337 = vmul.f32 %v336, %v195
        %v338 = vmul.f32 %v335, %v196
        %339 = vst [vmem:[#allocation2 + $0xa0] sm:$0xff] %v337
        %340 = vst [vmem:[#allocation2 + $0xa8] sm:$0xff] %v338
        %341 = vrot.lane.b32.xlu0 %v206, 97
        %v342 = vpop.permute.xlu0 %341
        %343 = vrot.lane.b32.xlu0 %v207, 97
        %v344 = vpop.permute.xlu0 %343
        %345 = vrot.lane.b32.xlu0 %v208, 97
        %v346 = vpop.permute.xlu0 %345
        %vm347 = vcmp.lt.s32.totalorder %v216, 97
        %v348 = vsel %vm347, %v344, %v346
        %v349 = vsel %vm347, %v342, %v344
        %v350 = vmul.f32 %v349, %v198
        %v351 = vmul.f32 %v348, %v199
        %352 = vst [vmem:[#allocation2 + $0xb0] sm:$0xff] %v350
        %353 = vst [vmem:[#allocation2 + $0xb8] sm:$0xff] %v351
        %354 = vrot.lane.b32.xlu0 %v206, 96
        %v355 = vpop.permute.xlu0 %354
        %356 = vrot.lane.b32.xlu0 %v207, 96
        %v357 = vpop.permute.xlu0 %356
        %358 = vrot.lane.b32.xlu0 %v208, 96
        %v359 = vpop.permute.xlu0 %358
        %vm360 = vcmp.lt.s32.totalorder %v216, 96
        %v361 = vsel %vm360, %v357, %v359
        %v362 = vsel %vm360, %v355, %v357
        %363 = vst [vmem:[#allocation2 + $0xc0] sm:$0xff] %v362
        %364 = vst [vmem:[#allocation2 + $0xc8] sm:$0xff] %v361
        %365 = vrot.lane.b32.xlu0 %v206, 95
        %v366 = vpop.permute.xlu0 %365
        %367 = vrot.lane.b32.xlu0 %v207, 95
        %v368 = vpop.permute.xlu0 %367
        %369 = vrot.lane.b32.xlu0 %v208, 95
        %v370 = vpop.permute.xlu0 %369
        %vm371 = vcmp.lt.s32.totalorder %v216, 95
        %v372 = vsel %vm371, %v368, %v370
        %v373 = vsel %vm371, %v366, %v368
        %v374 = vmul.f32 %v373, %v201
        %v375 = vmul.f32 %v372, %v202
        %376 = vst [vmem:[#allocation2 + $0xd0] sm:$0xff] %v374
        %377 = vst [vmem:[#allocation2 + $0xd8] sm:$0xff] %v375
        %378 = vrot.lane.b32.xlu0 %v206, 94
        %v379 = vpop.permute.xlu0 %378
        %380 = vrot.lane.b32.xlu0 %v207, 94
        %v381 = vpop.permute.xlu0 %380
        %382 = vrot.lane.b32.xlu0 %v208, 94
        %v383 = vpop.permute.xlu0 %382
        %vm384 = vcmp.lt.s32.totalorder %v216, 94
        %v385 = vsel %vm384, %v381, %v383
        %v386 = vsel %vm384, %v379, %v381
        %v387 = vmul.f32 %v386, %v204
        %v388 = vmul.f32 %v385, %v205
        %389 = vst [vmem:[#allocation2 + $0xe0] sm:$0xff] %v387
        %390 = vst [vmem:[#allocation2 + $0xe8] sm:$0xff] %v388
        %391 = vrot.lane.b32.xlu0 %v206, 82
        %v392 = vpop.permute.xlu0 %391
        %393 = vrot.lane.b32.xlu0 %v207, 82
        %v394 = vpop.permute.xlu0 %393
        %395 = vrot.lane.b32.xlu0 %v208, 82
        %v396 = vpop.permute.xlu0 %395
        %vm397 = vcmp.lt.s32.totalorder %v216, 82
        %v398 = vsel %vm397, %v394, %v396
        %v399 = vsel %vm397, %v392, %v394
        %v400 = vmul.f32 %v399, %v195
        %v401 = vmul.f32 %v398, %v196
        %402 = vst [vmem:[#allocation2 + $0xf0] sm:$0xff] %v400
        %403 = vst [vmem:[#allocation2 + $0xf8] sm:$0xff] %v401
        %404 = vrot.lane.b32.xlu0 %v206, 81
        %v405 = vpop.permute.xlu0 %404
        %406 = vrot.lane.b32.xlu0 %v207, 81
        %v407 = vpop.permute.xlu0 %406
        %408 = vrot.lane.b32.xlu0 %v208, 81
        %v409 = vpop.permute.xlu0 %408
        %vm410 = vcmp.lt.s32.totalorder %v216, 81
        %v411 = vsel %vm410, %v407, %v409
        %v412 = vsel %vm410, %v405, %v407
        %v413 = vmul.f32 %v412, %v198
        %v414 = vmul.f32 %v411, %v199
        %415 = vst [vmem:[#allocation2 + $0x100] sm:$0xff] %v413
        %416 = vst [vmem:[#allocation2 + $0x108] sm:$0xff] %v414
        %417 = vrot.lane.b32.xlu0 %v206, 80
        %v418 = vpop.permute.xlu0 %417
        %419 = vrot.lane.b32.xlu0 %v207, 80
        %v420 = vpop.permute.xlu0 %419
        %421 = vrot.lane.b32.xlu0 %v208, 80
        %v422 = vpop.permute.xlu0 %421
        %vm423 = vcmp.lt.s32.totalorder %v216, 80
        %v424 = vsel %vm423, %v420, %v422
        %v425 = vsel %vm423, %v418, %v420
        %426 = vst [vmem:[#allocation2 + $0x110] sm:$0xff] %v425
        %427 = vst [vmem:[#allocation2 + $0x118] sm:$0xff] %v424
        %428 = vrot.lane.b32.xlu0 %v206, 79
        %v429 = vpop.permute.xlu0 %428
        %430 = vrot.lane.b32.xlu0 %v207, 79
        %v431 = vpop.permute.xlu0 %430
        %432 = vrot.lane.b32.xlu0 %v208, 79
        %v433 = vpop.permute.xlu0 %432
        %vm434 = vcmp.lt.s32.totalorder %v216, 79
        %v435 = vsel %vm434, %v431, %v433
        %v436 = vsel %vm434, %v429, %v431
        %v437 = vmul.f32 %v436, %v201
        %v438 = vmul.f32 %v435, %v202
        %439 = vst [vmem:[#allocation2 + $0x120] sm:$0xff] %v437
        %440 = vst [vmem:[#allocation2 + $0x128] sm:$0xff] %v438
        %441 = vrot.lane.b32.xlu0 %v206, 78
        %v442 = vpop.permute.xlu0 %441
        %443 = vrot.lane.b32.xlu0 %v207, 78
        %v444 = vpop.permute.xlu0 %443
        %445 = vrot.lane.b32.xlu0 %v208, 78
        %v446 = vpop.permute.xlu0 %445
        %vm447 = vcmp.lt.s32.totalorder %v216, 78
        %v448 = vsel %vm447, %v444, %v446
        %v449 = vsel %vm447, %v442, %v444
        %v450 = vmul.f32 %v449, %v204
        %v451 = vmul.f32 %v448, %v205
        %452 = vst [vmem:[#allocation2 + $0x130] sm:$0xff] %v450
        %453 = vst [vmem:[#allocation2 + $0x138] sm:$0xff] %v451
        %454 = vrot.lane.b32.xlu0 %v206, 66
        %v455 = vpop.permute.xlu0 %454
        %456 = vrot.lane.b32.xlu0 %v207, 66
        %v457 = vpop.permute.xlu0 %456
        %458 = vrot.lane.b32.xlu0 %v208, 66
        %v459 = vpop.permute.xlu0 %458
        %vm460 = vcmp.lt.s32.totalorder %v216, 66
        %v461 = vsel %vm460, %v457, %v459
        %v462 = vsel %vm460, %v455, %v457
        %v463 = vmul.f32 %v462, %v195
        %v464 = vmul.f32 %v461, %v196
        %465 = vst [vmem:[#allocation2 + $0x140] sm:$0xff] %v463
        %466 = vst [vmem:[#allocation2 + $0x148] sm:$0xff] %v464
        %467 = vrot.lane.b32.xlu0 %v206, 65
        %v468 = vpop.permute.xlu0 %467
        %469 = vrot.lane.b32.xlu0 %v207, 65
        %v470 = vpop.permute.xlu0 %469
        %471 = vrot.lane.b32.xlu0 %v208, 65
        %v472 = vpop.permute.xlu0 %471
        %vm473 = vcmp.lt.s32.totalorder %v216, 65
        %v474 = vsel %vm473, %v470, %v472
        %v475 = vsel %vm473, %v468, %v470
        %v476 = vmul.f32 %v475, %v198
        %v477 = vmul.f32 %v474, %v199
        %478 = vst [vmem:[#allocation2 + $0x150] sm:$0xff] %v476
        %479 = vst [vmem:[#allocation2 + $0x158] sm:$0xff] %v477
        %480 = vrot.lane.b32.xlu0 %v206, 64
        %v481 = vpop.permute.xlu0 %480
        %482 = vrot.lane.b32.xlu0 %v207, 64
        %v483 = vpop.permute.xlu0 %482
        %484 = vrot.lane.b32.xlu0 %v208, 64
        %v485 = vpop.permute.xlu0 %484
        %vm486 = vcmp.lt.s32.totalorder %v216, 64
        %v487 = vsel %vm486, %v483, %v485
        %v488 = vsel %vm486, %v481, %v483
        %489 = vst [vmem:[#allocation2 + $0x160] sm:$0xff] %v488
        %490 = vst [vmem:[#allocation2 + $0x168] sm:$0xff] %v487
        %491 = vrot.lane.b32.xlu0 %v206, 63
        %v492 = vpop.permute.xlu0 %491
        %493 = vrot.lane.b32.xlu0 %v207, 63
        %v494 = vpop.permute.xlu0 %493
        %495 = vrot.lane.b32.xlu0 %v208, 63
        %v496 = vpop.permute.xlu0 %495
        %vm497 = vcmp.lt.s32.totalorder %v216, 63
        %v498 = vsel %vm497, %v494, %v496
        %v499 = vsel %vm497, %v492, %v494
        %v500 = vmul.f32 %v499, %v201
        %v501 = vmul.f32 %v498, %v202
        %502 = vst [vmem:[#allocation2 + $0x170] sm:$0xff] %v500
        %503 = vst [vmem:[#allocation2 + $0x178] sm:$0xff] %v501
        %504 = vrot.lane.b32.xlu0 %v206, 62
        %v505 = vpop.permute.xlu0 %504
        %506 = vrot.lane.b32.xlu0 %v207, 62
        %v507 = vpop.permute.xlu0 %506
        %508 = vrot.lane.b32.xlu0 %v208, 62
        %v509 = vpop.permute.xlu0 %508
        %vm510 = vcmp.lt.s32.totalorder %v216, 62
        %v511 = vsel %vm510, %v507, %v509
        %v512 = vsel %vm510, %v505, %v507
        %v513 = vmul.f32 %v512, %v204
        %v514 = vmul.f32 %v511, %v205
        %515 = vst [vmem:[#allocation2 + $0x180] sm:$0xff] %v513
        %516 = vst [vmem:[#allocation2 + $0x188] sm:$0xff] %v514
        %v517 = vld [vmem:[%s1] sm:$0xff]
        %v518 = vld [vmem:[%s1 + $0x8] sm:$0xff]
        %v519 = vld [vmem:[%s1 + $0x10] sm:$0xf]
        %v520 = vld [vmem:[%s1 + $0x18] sm:$0xf]
        %v521 = vld [vmem:[#allocation2] sm:$0xff]
        %v522 = vld [vmem:[#allocation2 + $0x8] sm:$0xff]
        %v523 = vld [vmem:[#allocation2 + $0x10] sm:$0xff]
        %v524 = vld [vmem:[#allocation2 + $0x18] sm:$0xff]
        %v525 = vld [vmem:[#allocation2 + $0x20] sm:$0xff]
        %v526 = vld [vmem:[#allocation2 + $0x28] sm:$0xff]
        %v527 = vld [vmem:[#allocation2 + $0x30] sm:$0xff]
        %v528 = vld [vmem:[#allocation2 + $0x38] sm:$0xff]
        %v529 = vld [vmem:[#allocation2 + $0x40] sm:$0xff]
        %v530 = vld [vmem:[#allocation2 + $0x48] sm:$0xff]
        %v531 = vld [vmem:[#allocation2 + $0x50] sm:$0xff]
        %v532 = vld [vmem:[#allocation2 + $0x58] sm:$0xff]
        %v533 = vld [vmem:[#allocation2 + $0x60] sm:$0xff]
        %v534 = vld [vmem:[#allocation2 + $0x68] sm:$0xff]
        %v535 = vld [vmem:[#allocation2 + $0x70] sm:$0xff]
        %v536 = vld [vmem:[#allocation2 + $0x78] sm:$0xff]
        %v537 = vld [vmem:[#allocation2 + $0x80] sm:$0xff]
        %v538 = vld [vmem:[#allocation2 + $0x88] sm:$0xff]
        %v539 = vld [vmem:[#allocation2 + $0x90] sm:$0xff]
        %v540 = vld [vmem:[#allocation2 + $0x98] sm:$0xff]
        %v541 = vld [vmem:[#allocation2 + $0xa0] sm:$0xff]
        %v542 = vld [vmem:[#allocation2 + $0xa8] sm:$0xff]
        %v543 = vld [vmem:[#allocation2 + $0xb0] sm:$0xff]
        %v544 = vld [vmem:[#allocation2 + $0xb8] sm:$0xff]
        %v545 = vld [vmem:[#allocation2 + $0xc0] sm:$0xff]
        %v546 = vld [vmem:[#allocation2 + $0xc8] sm:$0xff]
        %v547 = vld [vmem:[#allocation2 + $0xd0] sm:$0xff]
        %v548 = vld [vmem:[#allocation2 + $0xd8] sm:$0xff]
        %v549 = vld [vmem:[#allocation2 + $0xe0] sm:$0xff]
        %v550 = vld [vmem:[#allocation2 + $0xe8] sm:$0xff]
        %v551 = vld [vmem:[#allocation2 + $0xf0] sm:$0xff]
        %v552 = vld [vmem:[#allocation2 + $0xf8] sm:$0xff]
        %v553 = vld [vmem:[#allocation2 + $0x100] sm:$0xff]
        %v554 = vld [vmem:[#allocation2 + $0x108] sm:$0xff]
        %v555 = vld [vmem:[#allocation2 + $0x110] sm:$0xff]
        %v556 = vld [vmem:[#allocation2 + $0x118] sm:$0xff]
        %v557 = vld [vmem:[#allocation2 + $0x120] sm:$0xff]
        %v558 = vld [vmem:[#allocation2 + $0x128] sm:$0xff]
        %v559 = vld [vmem:[#allocation2 + $0x130] sm:$0xff]
        %v560 = vld [vmem:[#allocation2 + $0x138] sm:$0xff]
        %v561 = vld [vmem:[#allocation2 + $0x140] sm:$0xff]
        %v562 = vld [vmem:[#allocation2 + $0x148] sm:$0xff]
        %v563 = vld [vmem:[#allocation2 + $0x150] sm:$0xff]
        %v564 = vld [vmem:[#allocation2 + $0x158] sm:$0xff]
        %v565 = vld [vmem:[#allocation2 + $0x160] sm:$0xff]
        %v566 = vld [vmem:[#allocation2 + $0x168] sm:$0xff]
        %v567 = vld [vmem:[#allocation2 + $0x170] sm:$0xff]
        %v568 = vld [vmem:[#allocation2 + $0x178] sm:$0xff]
        %v569 = vld [vmem:[#allocation2 + $0x180] sm:$0xff]
        %v570 = vld [vmem:[#allocation2 + $0x188] sm:$0xff]
        %v571 = vld [vmem:[%s2] sm:$0xff]
        %v572 = vld [vmem:[%s2 + $0x8] sm:$0xf]
        %574 = vset.pattern.permute.xlu0 0
        %575 = vperm.xlu0 %574, %v571
        %v576 = vpop.permute.xlu0 %575
        %579 = vset.pattern.permute.xlu0 0
        %580 = vperm.xlu0 %579, %v572
        %v581 = vpop.permute.xlu0 %580
        %vm583 = vcmask 588800
        %v585 = vsel %vm583, %v518, 0
        %v588 = vsel %vm583, %v520, 0
        %590 = vmatprep.subr.mxu0 %v552
        %591 = vmatpush1.msra.mxu0 %v551
        %592 = vmatprep.subr.mxu0 %v550
        %593 = vmatpush1.msra.mxu0 %v549
        %594 = vmatprep.subr.mxu0 %v548
        %595 = vmatpush1.msra.mxu0 %v547
        %596 = vmatprep.subr.mxu0 %v546
        %597 = vmatpush1.msra.mxu0 %v545
        %598 = vmatprep.subr.mxu0 %v544
        %599 = vmatpush1.msra.mxu0 %v543
        %600 = vmatprep.subr.mxu0 %v542
        %601 = vmatpush1.msra.mxu0 %v541
        %602 = vmatprep.subr.mxu0 %v540
        %603 = vmatpush1.msra.mxu0 %v539
        %604 = vmatprep.subr.mxu0 %v538
        %605 = vmatpush1.msra.mxu0 %v537
        %606 = vmatprep.subr.mxu0 %v536
        %607 = vmatpush1.msra.mxu0 %v535
        %608 = vmatprep.subr.mxu0 %v534
        %609 = vmatpush1.msra.mxu0 %v533
        %610 = vmatprep.subr.mxu0 %v532
        %611 = vmatpush1.msra.mxu0 %v531
        %612 = vmatprep.subr.mxu0 %v530
        %613 = vmatpush1.msra.mxu0 %v529
        %614 = vmatprep.subr.mxu0 %v528
        %615 = vmatpush1.msra.mxu0 %v527
        %616 = vmatprep.subr.mxu0 %v526
        %617 = vmatpush1.msra.mxu0 %v525
        %618 = vmatprep.subr.mxu0 %v524
        %619 = vmatpush1.msra.mxu0 %v523
        %620 = vmatprep.subr.mxu0 %v522
        %621 = vmatpush1.msra.mxu0 %v521
        %622 = vmatprep.subr.mxu0 0.0
        %623 = vmatpush2.msra.mxu0 0.0
        %624 = vmatprep.subr.mxu0 0.0
        %625 = vmatpush2.msra.mxu0 0.0
        %626 = vmatprep.subr.mxu0 0.0
        %627 = vmatpush2.msra.mxu0 0.0
        %628 = vmatprep.subr.mxu0 0.0
        %629 = vmatpush2.msra.mxu0 0.0
        %630 = vmatprep.subr.mxu0 0.0
        %631 = vmatpush2.msra.mxu0 0.0
        %632 = vmatprep.subr.mxu0 0.0
        %633 = vmatpush2.msra.mxu0 0.0
        %634 = vmatprep.subr.mxu0 0.0
        %635 = vmatpush2.msra.mxu0 0.0
        %636 = vmatprep.subr.mxu0 %v570
        %637 = vmatpush2.msra.mxu0 %v569
        %638 = vmatprep.subr.mxu0 %v568
        %639 = vmatpush2.msra.mxu0 %v567
        %640 = vmatprep.subr.mxu0 %v566
        %641 = vmatpush2.msra.mxu0 %v565
        %642 = vmatprep.subr.mxu0 %v564
        %643 = vmatpush2.msra.mxu0 %v563
        %644 = vmatprep.subr.mxu0 %v562
        %645 = vmatpush2.msra.mxu0 %v561
        %646 = vmatprep.subr.mxu0 %v560
        %647 = vmatpush2.msra.mxu0 %v559
        %648 = vmatprep.subr.mxu0 %v558
        %649 = vmatpush2.msra.mxu0 %v557
        %650 = vmatprep.subr.mxu0 %v556
        %651 = vmatpush2.msra.mxu0 %v555
        %652 = vmatprep.subr.mxu0 %v554
        %653 = vmatpush2.msra.mxu0 %v553
        %654 = vmatprep.mubr.f32.mxu0 %v585
        %655 = vmatmul.mubr.f32.gmra.mxu0 %v517
        %v656 = vpop.f32.mrf.mxu0
        %v657 = vadd.f32 %v576, %v656
        %v658 = vpop.f32.mrf.mxu0
        %v659 = vadd.f32 %v576, %v658
        %660 = vmatprep.mubr.f32.mxu0 %v588
        %661 = vmatmul.mubr.f32.gmra.mxu0 %v519
        %v662 = vpop.f32.mrf.mxu0
        %v663 = vadd.f32 %v581, %v662
        %v664 = vpop.f32.mrf.mxu0
        %v665 = vadd.f32 %v581, %v664
        %666 = vdwg.mxu0
        %667 = vst [vmem:[%s187] sm:$0xff] %v657
        %668 = vst [vmem:[%s187 + $0x8] sm:$0xff] %v659
        %669 = vst [vmem:[%s187 + $0x10] sm:$0xf] %v663
        %670 = vst [vmem:[%s187 + $0x18] sm:$0xf] %v665
        %s671 = sand.u32 %s112, 1
        %s672 = sand.u32 %s112, 1
        %s673 = smul.addr %s672, 32
        %s674 = scalar_lea.vmem [#allocation3], %s673
        // Predicated region
        $region37: #{transp_conv_forward.1} parent=35 // pred_check
          %p675 = pneg %p122
        $region38: #{transp_conv_forward.1} parent=35 // pred_check_branch
          %677 = sbr.rel (%p675) target = $region40
        $region39: #{transp_conv_forward.1} parent=35 // pred_region
          %s678 = smul.u32 2, %s15
          %s679 = smul.addr %s678, 8
          %s680 = scalar_lea.vmem %s4, %s679
          // Predicated region
          $region41: #{transp_conv_forward.1} parent=39 // pred_check
            _
          $region42: #{transp_conv_forward.1} parent=39 // pred_check_branch
            %682 = sbr.rel (0) target = $region44
          $region43: #{transp_conv_forward.1} parent=39 // pred_region
            // Predicated region
            $region45: #{transp_conv_forward.1} parent=43 // pred_check
              _
            $region46: #{transp_conv_forward.1} parent=43 // pred_check_branch
              %684 = sbr.rel (0) target = $region48
            $region47: #{transp_conv_forward.1} parent=43 // pred_region
              loop: start=0, step=1, limit=1
              $region49: #{transp_conv_forward.1} parent=47 // loop_pre_header
                _
              $region50: #{transp_conv_forward.1} parent=47 // loop_header
                %s686 = sphi 0, %s690
                %p687 = scmp.ge.s32.totalorder %s686, 1
                %s691 = sphi %s674, %s674
                %s692 = sphi %s680, %s680
              $region51: #{transp_conv_forward.1} parent=47 // loop_header_branch
                %689 = sbr.rel (%p687) target = $region55
              $region52: #{transp_conv_forward.1} parent=47 // loop_body
                %v693 = vld [vmem:[%s691] sm:$0xff]
                %694 = vst [vmem:[%s692] sm:$0xff] %v693
                %v695 = vld [vmem:[%s691 + $0x8] sm:$0xff]
                %696 = vst [vmem:[%s692 + $0x8] sm:$0xff] %v695
                %v697 = vld [vmem:[%s691 + $0x10] sm:$0xff]
                %698 = vst [vmem:[%s692 + $0x20] sm:$0xff] %v697
                %v699 = vld [vmem:[%s691 + $0x18] sm:$0xff]
                %700 = vst [vmem:[%s692 + $0x28] sm:$0xff] %v699
              $region53: #{transp_conv_forward.1} parent=47 // loop_footer
                %s690 = sadd.s32 1, %s686
              $region54: #{transp_conv_forward.1} parent=47 // loop_footer_branch
                %685 = sbr.rel target = $region50
              $region55: #{transp_conv_forward.1} parent=47 // loop_exit
                _
            $region48: #{transp_conv_forward.1} parent=43 // pred_fallthru
              _
            // Predicated region
            $region56: #{transp_conv_forward.1} parent=43 // pred_check
              _
            $region57: #{transp_conv_forward.1} parent=43 // pred_check_branch
              %702 = sbr.rel target = $region59
            $region58: #{transp_conv_forward.1} parent=43 // pred_region
              _
            $region59: #{transp_conv_forward.1} parent=43 // pred_fallthru
              _
          $region44: #{transp_conv_forward.1} parent=39 // pred_fallthru
            _
          %703 = vnop
        $region40: #{transp_conv_forward.1} parent=35 // pred_fallthru
          _
      $region36: #{transp_conv_forward.1} parent=5 // pred_fallthru
        _
      %p704 = scmp.le.s32.totalorder 2, %s10
      // Predicated region
      $region60: #{transp_conv_forward.1} parent=5 // pred_check
        %p705 = pneg %p704
      $region61: #{transp_conv_forward.1} parent=5 // pred_check_branch
        %707 = sbr.rel (%p705) target = $region63
      $region62: #{transp_conv_forward.1} parent=5 // pred_region
        %s708 = ssub.s32 %s10, 2
        // Predicated region
        $region64: #{transp_conv_forward.1} parent=62 // pred_check
          %p709 = pneg %p128
        $region65: #{transp_conv_forward.1} parent=62 // pred_check_branch
          %711 = sbr.rel (%p709) target = $region67
        $region66: #{transp_conv_forward.1} parent=62 // pred_region
          %s712 = sand.u32 %s113, 1
          %s713 = sand.u32 %s113, 1
          %s714 = smul.addr %s713, 32
          %s715 = scalar_lea.vmem [#allocation3], %s714
        $region67: #{transp_conv_forward.1} parent=62 // pred_fallthru
          _
      $region63: #{transp_conv_forward.1} parent=5 // pred_fallthru
        _
    $region6: #{transp_conv_forward.1} parent=1 // loop_footer
      %s14 = sadd.s32 1, %s10
    $region7: #{transp_conv_forward.1} parent=1 // loop_footer_branch
      %9 = sbr.rel target = $region3
    $region8: #{transp_conv_forward.1} parent=1 // loop_exit
      _

</llo_original>
